<compile_context>
chip_gen: v6e
topology: v6e:2x2x1
jax: 0.10.0
libtpu: 0.0.40
codegen_flags: <defaults>
</compile_context>

<pallas_src>
import jax
import jax.numpy as jnp
from jax.experimental import pallas as pl
from jax.experimental.pallas import tpu as pltpu


def _round_up(x, m):
    return (x + m - 1) // m * m


def _cdiv(a, b):
    return (a + b - 1) // b


def _vmem_capacity_bytes():
    try:
        info = pltpu.get_tpu_info()
        cap = getattr(info, "vmem_capacity_bytes", None)
        if cap:
            return int(cap)
    except Exception:
        pass
    return 64 * 1024 * 1024  # conservative default: v7x per-TensorCore VMEM


def _make_kernel(rows_p, rows_tile, tiles_per_split, needs_mask):
    def kernel(pred_ref, true_ref, mse_ref, kl_ref, acc_mse, acc_kl):
        s = pl.program_id(2)  # spatial reduction axis (innermost, "arbitrary")

        @pl.when(s == 0)
        def _():
            acc_mse[...] = jnp.zeros_like(acc_mse)
            acc_kl[...] = jnp.zeros_like(acc_kl)

        p = pred_ref[...].astype(jnp.float32)   # (C, rows_tile, 128)
        t = true_ref[...].astype(jnp.float32)   # (C, rows_tile, 128)

        if needs_mask:
            # Zero rows beyond the true (padded-to-128) spatial extent; handles
            # the non-divisible last tile and the clamped duplicate tiles on the
            # second parallel split.  Padded-but-valid zero rows already
            # contribute exactly 0 to both terms.
            blk = pl.program_id(1) * tiles_per_split + s
            row_ids = (jax.lax.broadcasted_iota(jnp.int32, (1, rows_tile, 128), 1)
                       + blk * rows_tile)
            valid = row_ids < rows_p
            p = jnp.where(valid, p, 0.0)
            t = jnp.where(valid, t, 0.0)

        # --- MSE contribution ---
        diff = p - t
        contrib_mse = diff * diff

        # --- log_softmax over the channel axis (leading dim -> VPU/EUP only) ---
        m = jnp.max(p, axis=0, keepdims=True)                               # (1,R,128)
        lse = jnp.log(jnp.sum(jnp.exp(p - m), axis=0, keepdims=True)) + m   # (1,R,128)
        log_p = p - lse

        # --- KL contribution: xlogy(t, t) - t * log_p (double-where safe log) ---
        t_safe = jnp.where(t > 0.0, t, 1.0)
        xlogy_tt = jnp.where(t > 0.0, t * jnp.log(t_safe), 0.0)
        contrib_kl = xlogy_tt - t * log_p

        # Fold C and row-groups into (8, 128) partials with pure VPU adds
        # (the (rows_tile,128)->(rows_tile//8,8,128) reshape is sublane-preserving).
        part_mse = contrib_mse.sum(axis=0).reshape(rows_tile // 8, 8, 128).sum(axis=0)
        part_kl = contrib_kl.sum(axis=0).reshape(rows_tile // 8, 8, 128).sum(axis=0)
        acc_mse[...] += part_mse
        acc_kl[...] += part_kl

        # Write the lane-dense partials; final scalar reduce happens in the wrapper.
        @pl.when(s == pl.num_programs(2) - 1)
        def _():
            mse_ref[...] = acc_mse[...]
            kl_ref[...] = acc_kl[...]

    return kernel


def colorization_loss(ab_pred, ab_true, lambda_g=0.1, lambda_s=0.1):
    """JAX/Pallas equivalent of ColorizationLoss.forward (NCHW inputs)."""
    N, C, H, W = ab_pred.shape
    HW = H * W
    itemsize = jnp.dtype(ab_pred.dtype).itemsize
    sub = max(8, 32 // itemsize)          # sublane quantum: 8 (f32) / 16 (bf16)
    quantum = sub * 128

    # Minimal pad of the flattened spatial dim so the free reshape to
    # (N, C, rows_p, 128) is valid; zero padding contributes exactly 0.
    hw_p = _round_up(HW, quantum)
    rows_p = hw_p // 128

    # Per-generation VMEM budget.
    vmem_cap = _vmem_capacity_bytes()
    if vmem_cap >= 96 * 1024 * 1024:      # v5e / v6e: 128 MiB VMEM
        block_budget = 8 * 1024 * 1024
        vmem_limit = 64 * 1024 * 1024
    else:                                 # v7x: 64 MiB per TensorCore
        block_budget = 4 * 1024 * 1024
        vmem_limit = 40 * 1024 * 1024

    max_rows = max(sub, (block_budget // (C * 128 * itemsize)) // sub * sub)
    rows_tile = min(rows_p, max_rows)
    num_tiles = _cdiv(rows_p, rows_tile)

    # If a single batch fits in one tile, split it so both v7x cores get work.
    if N == 1 and num_tiles == 1 and rows_p >= 2 * sub:
        rows_tile = _round_up(_cdiv(rows_p, 2), sub)
        num_tiles = _cdiv(rows_p, rows_tile)

    # Second parallel axis: shards the spatial reduction across v7x's two
    # TensorCores (neutral on single-core v5e/v6e).
    P = 2 if num_tiles >= 2 else 1
    tiles_per_split = _cdiv(num_tiles, P)
    needs_mask = (P * tiles_per_split * rows_tile) != rows_p

    pred = ab_pred.reshape(N, C, HW)
    true = ab_true.reshape(N, C, HW)
    if hw_p != HW:
        # TODO(synk): for HW not a multiple of sub*128 this still copies the
        # inputs once; a lane-level in-kernel mask would avoid the pad entirely.
        pad = ((0, 0), (0, 0), (0, hw_p - HW))
        pred = jnp.pad(pred, pad)
        true = jnp.pad(true, pad)
    pred = pred.reshape(N, C, rows_p, 128)
    true = true.reshape(N, C, rows_p, 128)

    last_blk = num_tiles - 1
    if needs_mask:
        def in_map(n, p, s):
            # Clamp so boundary / duplicate tiles never index out of bounds;
            # the in-kernel row mask zeroes their contribution.
            return (n, 0, jnp.minimum(p * tiles_per_split + s, last_blk), 0)
    else:
        def in_map(n, p, s):
            return (n, 0, p * tiles_per_split + s, 0)

    in_spec = pl.BlockSpec((None, C, rows_tile, 128), in_map)
    out_spec = pl.BlockSpec((None, None, 8, 128), lambda n, p, s: (n, p, 0, 0))

    numel_pad = N * C * rows_p * 128
    cost = pl.CostEstimate(
        flops=12 * numel_pad,
        transcendentals=3 * numel_pad,
        bytes_accessed=2 * numel_pad * itemsize + 2 * N * P * 8 * 128 * 4,
    )

    kernel = _make_kernel(rows_p, rows_tile, tiles_per_split, needs_mask)

    mse_part, kl_part = pl.pallas_call(
        kernel,
        out_shape=(
            jax.ShapeDtypeStruct((N, P, 8, 128), jnp.float32),
            jax.ShapeDtypeStruct((N, P, 8, 128), jnp.float32),
        ),
        grid_spec=pltpu.PrefetchScalarGridSpec(
            num_scalar_prefetch=0,
            grid=(N, P, tiles_per_split),
            in_specs=[in_spec, in_spec],
            out_specs=[out_spec, out_spec],
            scratch_shapes=[
                pltpu.VMEM((8, 128), jnp.float32),
                pltpu.VMEM((8, 128), jnp.float32),
            ],
        ),
        compiler_params=pltpu.CompilerParams(
            dimension_semantics=("parallel", "parallel", "arbitrary"),
            vmem_limit_bytes=vmem_limit,
        ),
        cost_estimate=cost,
    )(pred, true)

    numel = jnp.float32(N * C * H * W)   # original numel (padding contributes 0)
    le = jnp.sum(mse_part) / numel
    ls = jnp.sum(kl_part) / numel
    return lambda_g * le + lambda_s * ls


def _reference_loss(ab_pred, ab_true, lambda_g=0.1, lambda_s=0.1):
    le_ref = jnp.mean((ab_pred - ab_true) ** 2)
    logp_ref = jax.nn.log_softmax(ab_pred, axis=1)
    xlogy_ref = jnp.where(ab_true == 0.0, 0.0, ab_true * jnp.log(ab_true))
    ls_ref = jnp.mean(xlogy_ref - ab_true * logp_ref)
    return lambda_g * le_ref + lambda_s * ls_ref


if __name__ == "__main__":
    key = jax.random.PRNGKey(0)
    k1, k2, k3, k4 = jax.random.split(key, 4)

    # Case 1: canonical small shape (no masking path, single spatial tile/batch).
    N, C, H, W = 2, 4, 16, 16
    ab_pred = jax.random.normal(k1, (N, C, H, W), dtype=jnp.float32)
    ab_true = jax.nn.softmax(
        jax.random.normal(k2, (N, C, H, W), dtype=jnp.float32), axis=1)

    loss = colorization_loss(ab_pred, ab_true, lambda_g=0.1, lambda_s=0.1)
    jax.block_until_ready(loss)
    loss_ref = _reference_loss(ab_pred, ab_true, 0.1, 0.1)
    assert jnp.allclose(loss, loss_ref, rtol=1e-5, atol=1e-6), (loss, loss_ref)

    # Case 2: N=1, odd C, awkward HW -> exercises the two-way spatial split,
    # clamped index_map and in-kernel row masking.
    N2, C2, H2, W2 = 1, 3, 48, 48
    ab_pred2 = jax.random.normal(k3, (N2, C2, H2, W2), dtype=jnp.float32)
    ab_true2 = jax.nn.softmax(
        jax.random.normal(k4, (N2, C2, H2, W2), dtype=jnp.float32), axis=1)

    loss2 = colorization_loss(ab_pred2, ab_true2, lambda_g=0.1, lambda_s=0.1)
    jax.block_until_ready(loss2)
    loss2_ref = _reference_loss(ab_pred2, ab_true2, 0.1, 0.1)
    assert jnp.allclose(loss2, loss2_ref, rtol=1e-5, atol=1e-6), (loss2, loss2_ref)

    print("KERNEL_OK")
</pallas_src>

<mosaic_0001>
module attributes {stable_mosaic.version = 11 : i64} {
  func.func @kernel(%arg0: i32, %arg1: i32, %arg2: i32, %arg3: memref<1x4x8x128xf32, #tpu.memory_space<vmem>>, %arg4: memref<1x4x8x128xf32, #tpu.memory_space<vmem>>, %arg5: memref<1x1x8x128xf32, #tpu.memory_space<vmem>>, %arg6: memref<1x1x8x128xf32, #tpu.memory_space<vmem>>, %arg7: memref<8x128xf32, #tpu.memory_space<vmem>>, %arg8: memref<8x128xf32, #tpu.memory_space<vmem>>) attributes {dimension_semantics = [#tpu.dimension_semantics<parallel>, #tpu.dimension_semantics<parallel>, #tpu.dimension_semantics<arbitrary>], iteration_bounds = array<i64: 2, 1, 1>, scalar_prefetch = 0 : i64, scratch_operands = 2 : i64, tpu.core_type = #tpu.core_type<tc>, window_params = [{transform_indices = @transform_0, window_bounds = array<i64: 1, 4, 8, 128>}, {transform_indices = @transform_1, window_bounds = array<i64: 1, 4, 8, 128>}, {transform_indices = @transform_2, window_bounds = array<i64: 1, 1, 8, 128>}, {transform_indices = @transform_3, window_bounds = array<i64: 1, 1, 8, 128>}]} {
    %c0_i32 = arith.constant 0 : i32
    %0 = arith.cmpi eq, %arg2, %c0_i32 : i32
    %1 = arith.extui %0 : i1 to i32
    %c0_i32_0 = arith.constant 0 : i32
    %2 = arith.cmpi ne, %1, %c0_i32_0 : i32
    scf.if %2 {
      %cst_27 = arith.constant 0.000000e+00 : f32
      %47 = vector.broadcast %cst_27 : f32 to vector<8x128xf32>
      %c0_28 = arith.constant 0 : index
      %c0_29 = arith.constant 0 : index
      %48 = vector.load %arg7[%c0_28, %c0_29] : memref<8x128xf32, #tpu.memory_space<vmem>>, vector<8x128xf32>
      tpu.vector_store %arg7[%c0_28, %c0_29], %47 {strides = array<i32>} : memref<8x128xf32, #tpu.memory_space<vmem>>, vector<8x128xf32>,
      %cst_30 = arith.constant 0.000000e+00 : f32
      %49 = vector.broadcast %cst_30 : f32 to vector<8x128xf32>
      %c0_31 = arith.constant 0 : index
      %c0_32 = arith.constant 0 : index
      %50 = vector.load %arg8[%c0_31, %c0_32] : memref<8x128xf32, #tpu.memory_space<vmem>>, vector<8x128xf32>
      tpu.vector_store %arg8[%c0_31, %c0_32], %49 {strides = array<i32>} : memref<8x128xf32, #tpu.memory_space<vmem>>, vector<8x128xf32>,
    } else {
    }
    %c0 = arith.constant 0 : index
    %c0_1 = arith.constant 0 : index
    %c0_2 = arith.constant 0 : index
    %c0_3 = arith.constant 0 : index
    %3 = vector.load %arg3[%c0, %c0_1, %c0_2, %c0_3] : memref<1x4x8x128xf32, #tpu.memory_space<vmem>>, vector<1x4x8x128xf32>
    %4 = vector.shape_cast %3 : vector<1x4x8x128xf32> to vector<4x8x128xf32>
    %c0_4 = arith.constant 0 : index
    %c0_5 = arith.constant 0 : index
    %c0_6 = arith.constant 0 : index
    %c0_7 = arith.constant 0 : index
    %5 = vector.load %arg4[%c0_4, %c0_5, %c0_6, %c0_7] : memref<1x4x8x128xf32, #tpu.memory_space<vmem>>, vector<1x4x8x128xf32>
    %6 = vector.shape_cast %5 : vector<1x4x8x128xf32> to vector<4x8x128xf32>
    %7 = arith.subf %4, %6 : vector<4x8x128xf32>
    %8 = arith.mulf %7, %7 : vector<4x8x128xf32>
    %cst = arith.constant dense<0xFF800000> : vector<8x128xf32>
    %9 = vector.multi_reduction <maximumf>, %4, %cst [0] : vector<4x8x128xf32> to vector<8x128xf32>
    %10 = vector.shape_cast %9 : vector<8x128xf32> to vector<1x8x128xf32>
    %11 = vector.broadcast %10 : vector<1x8x128xf32> to vector<4x8x128xf32>
    %12 = arith.subf %4, %11 : vector<4x8x128xf32>
    %13 = math.exp %12 : vector<4x8x128xf32>
    %cst_8 = arith.constant dense<0.000000e+00> : vector<8x128xf32>
    %14 = vector.multi_reduction <add>, %13, %cst_8 [0] : vector<4x8x128xf32> to vector<8x128xf32>
    %15 = vector.shape_cast %14 : vector<8x128xf32> to vector<1x8x128xf32>
    %16 = math.log %15 : vector<1x8x128xf32>
    %17 = arith.addf %16, %10 : vector<1x8x128xf32>
    %18 = vector.broadcast %17 : vector<1x8x128xf32> to vector<4x8x128xf32>
    %19 = arith.subf %4, %18 : vector<4x8x128xf32>
    %cst_9 = arith.constant 0.000000e+00 : f32
    %20 = vector.broadcast %cst_9 : f32 to vector<4x8x128xf32>
    %21 = arith.cmpf ogt, %6, %20 : vector<4x8x128xf32>
    %cst_10 = arith.constant 1.000000e+00 : f32
    %22 = vector.broadcast %cst_10 : f32 to vector<4x8x128xf32>
    %23 = arith.select %21, %6, %22 : vector<4x8x128xi1>, vector<4x8x128xf32>
    %cst_11 = arith.constant 0.000000e+00 : f32
    %24 = vector.broadcast %cst_11 : f32 to vector<4x8x128xf32>
    %25 = arith.cmpf ogt, %6, %24 : vector<4x8x128xf32>
    %26 = math.log %23 : vector<4x8x128xf32>
    %27 = arith.mulf %6, %26 : vector<4x8x128xf32>
    %cst_12 = arith.constant 0.000000e+00 : f32
    %28 = vector.broadcast %cst_12 : f32 to vector<4x8x128xf32>
    %29 = arith.select %25, %27, %28 : vector<4x8x128xi1>, vector<4x8x128xf32>
    %30 = arith.mulf %6, %19 : vector<4x8x128xf32>
    %31 = arith.subf %29, %30 : vector<4x8x128xf32>
    %cst_13 = arith.constant dense<0.000000e+00> : vector<8x128xf32>
    %32 = vector.multi_reduction <add>, %8, %cst_13 [0] : vector<4x8x128xf32> to vector<8x128xf32>
    %33 = vector.shape_cast %32 : vector<8x128xf32> to vector<1x8x128xf32>
    %cst_14 = arith.constant dense<0.000000e+00> : vector<8x128xf32>
    %34 = vector.multi_reduction <add>, %33, %cst_14 [0] : vector<1x8x128xf32> to vector<8x128xf32>
    %cst_15 = arith.constant dense<0.000000e+00> : vector<8x128xf32>
    %35 = vector.multi_reduction <add>, %31, %cst_15 [0] : vector<4x8x128xf32> to vector<8x128xf32>
    %36 = vector.shape_cast %35 : vector<8x128xf32> to vector<1x8x128xf32>
    %cst_16 = arith.constant dense<0.000000e+00> : vector<8x128xf32>
    %37 = vector.multi_reduction <add>, %36, %cst_16 [0] : vector<1x8x128xf32> to vector<8x128xf32>
    %c0_17 = arith.constant 0 : index
    %c0_18 = arith.constant 0 : index
    %38 = vector.load %arg7[%c0_17, %c0_18] : memref<8x128xf32, #tpu.memory_space<vmem>>, vector<8x128xf32>
    %39 = arith.addf %38, %34 : vector<8x128xf32>
    %c0_19 = arith.constant 0 : index
    %c0_20 = arith.constant 0 : index
    %40 = vector.load %arg7[%c0_19, %c0_20] : memref<8x128xf32, #tpu.memory_space<vmem>>, vector<8x128xf32>
    tpu.vector_store %arg7[%c0_19, %c0_20], %39 {strides = array<i32>} : memref<8x128xf32, #tpu.memory_space<vmem>>, vector<8x128xf32>,
    %c0_21 = arith.constant 0 : index
    %c0_22 = arith.constant 0 : index
    %41 = vector.load %arg8[%c0_21, %c0_22] : memref<8x128xf32, #tpu.memory_space<vmem>>, vector<8x128xf32>
    %42 = arith.addf %41, %37 : vector<8x128xf32>
    %c0_23 = arith.constant 0 : index
    %c0_24 = arith.constant 0 : index
    %43 = vector.load %arg8[%c0_23, %c0_24] : memref<8x128xf32, #tpu.memory_space<vmem>>, vector<8x128xf32>
    tpu.vector_store %arg8[%c0_23, %c0_24], %42 {strides = array<i32>} : memref<8x128xf32, #tpu.memory_space<vmem>>, vector<8x128xf32>,
    %c0_i32_25 = arith.constant 0 : i32
    %44 = arith.cmpi eq, %arg2, %c0_i32_25 : i32
    %45 = arith.extui %44 : i1 to i32
    %c0_i32_26 = arith.constant 0 : i32
    %46 = arith.cmpi ne, %45, %c0_i32_26 : i32
    scf.if %46 {
      %c0_27 = arith.constant 0 : index
      %c0_28 = arith.constant 0 : index
      %47 = vector.load %arg7[%c0_27, %c0_28] : memref<8x128xf32, #tpu.memory_space<vmem>>, vector<8x128xf32>
      %c0_29 = arith.constant 0 : index
      %c0_30 = arith.constant 0 : index
      %c0_31 = arith.constant 0 : index
      %c0_32 = arith.constant 0 : index
      %48 = vector.load %arg5[%c0_29, %c0_30, %c0_31, %c0_32] : memref<1x1x8x128xf32, #tpu.memory_space<vmem>>, vector<1x1x8x128xf32>
      %49 = vector.shape_cast %48 : vector<1x1x8x128xf32> to vector<8x128xf32>
      %50 = vector.shape_cast %47 : vector<8x128xf32> to vector<1x1x8x128xf32>
      tpu.vector_store %arg5[%c0_29, %c0_30, %c0_31, %c0_32], %50 {strides = array<i32>} : memref<1x1x8x128xf32, #tpu.memory_space<vmem>>, vector<1x1x8x128xf32>,
      %c0_33 = arith.constant 0 : index
      %c0_34 = arith.constant 0 : index
      %51 = vector.load %arg8[%c0_33, %c0_34] : memref<8x128xf32, #tpu.memory_space<vmem>>, vector<8x128xf32>
      %c0_35 = arith.constant 0 : index
      %c0_36 = arith.constant 0 : index
      %c0_37 = arith.constant 0 : index
      %c0_38 = arith.constant 0 : index
      %52 = vector.load %arg6[%c0_35, %c0_36, %c0_37, %c0_38] : memref<1x1x8x128xf32, #tpu.memory_space<vmem>>, vector<1x1x8x128xf32>
      %53 = vector.shape_cast %52 : vector<1x1x8x128xf32> to vector<8x128xf32>
      %54 = vector.shape_cast %51 : vector<8x128xf32> to vector<1x1x8x128xf32>
      tpu.vector_store %arg6[%c0_35, %c0_36, %c0_37, %c0_38], %54 {strides = array<i32>} : memref<1x1x8x128xf32, #tpu.memory_space<vmem>>, vector<1x1x8x128xf32>,
    } else {
    }
    return
  }
  func.func @transform_0(%arg0: i32, %arg1: i32, %arg2: i32) -> (i32, i32, i32, i32) {
    %c1_i32 = arith.constant 1 : i32
    %0 = arith.muli %arg1, %c1_i32 : i32
    %1 = arith.addi %0, %arg2 : i32
    %c0_i32 = arith.constant 0 : i32
    %c0_i32_0 = arith.constant 0 : i32
    %c0_i32_1 = arith.constant 0 : i32
    return %arg0, %c0_i32, %1, %c0_i32_0 : i32, i32, i32, i32
  }
  func.func @transform_1(%arg0: i32, %arg1: i32, %arg2: i32) -> (i32, i32, i32, i32) {
    %c1_i32 = arith.constant 1 : i32
    %0 = arith.muli %arg1, %c1_i32 : i32
    %1 = arith.addi %0, %arg2 : i32
    %c0_i32 = arith.constant 0 : i32
    %c0_i32_0 = arith.constant 0 : i32
    %c0_i32_1 = arith.constant 0 : i32
    return %arg0, %c0_i32, %1, %c0_i32_0 : i32, i32, i32, i32
  }
  func.func @transform_2(%arg0: i32, %arg1: i32, %arg2: i32) -> (i32, i32, i32, i32) {
    %c0_i32 = arith.constant 0 : i32
    %c0_i32_0 = arith.constant 0 : i32
    %c0_i32_1 = arith.constant 0 : i32
    return %arg0, %arg1, %c0_i32, %c0_i32_0 : i32, i32, i32, i32
  }
  func.func @transform_3(%arg0: i32, %arg1: i32, %arg2: i32) -> (i32, i32, i32, i32) {
    %c0_i32 = arith.constant 0 : i32
    %c0_i32_0 = arith.constant 0 : i32
    %c0_i32_1 = arith.constant 0 : i32
    return %arg0, %arg1, %c0_i32, %c0_i32_0 : i32, i32, i32, i32
  }
}

</mosaic_0001>

<llo_original>
// kernel: tpu_custom_call.1
$region0: #{tpu_custom_call.1}
  #allocation0 [shape = 'u32[]', space=smem, size = 0x4, offset = 0x4, fixed_abs, tag = 'smem constant byte address 0x4 - core index']
  #allocation1 [shape = 'u32[144,128]{1,0:T(1,128)}', space=vmem, size = 0x12000, scoped, tag = 'internal scratch']
  #allocation2 [shape = 'f32[8,128]{1,0:T(8,128)}', space=vmem, size = 0x1000, scoped, tag = 'scratch operand']
  #allocation3 [shape = 'f32[8,128]{1,0:T(8,128)}', space=vmem, size = 0x1000, scoped, tag = 'scratch operand']
  %s0 = inlined_call_operand.hbm [shape: f32[2,4,8,128], index: 0, kind: input, shape index: {}]
  %s1 = inlined_call_operand.hbm [shape: f32[2,4,8,128], index: 1, kind: input, shape index: {}]
  %s2 = inlined_call_operand.hbm [shape: f32[2,1,8,128], index: 2, kind: output, shape index: {0}]
  %s3 = inlined_call_operand.hbm [shape: f32[2,1,8,128], index: 3, kind: output, shape index: {1}]
  %4 = xla_tuple %s2, %s3
  %s5 = sld [smem:[#allocation0]]
  $region65: #{tpu_custom_call.1} parent=0
    _
  %s7 = ssub.s32 1, %s5
  %s8 = scalar_select 0, %s7, %s5
  $region1: #{tpu_custom_call.1} parent=0
    #allocation4 [shape = 'u8[32768]{0}', space=vmem, size = 0x8000, scoped, tag = 'input window, operand 0']
    #allocation5 [shape = 's32[2]{0}', space=sflag, size = 0x8, scoped, tag = 'scoped memory for tpu_custom_call.1']
    #allocation6 [shape = 's32[2]{0}', space=sflag, size = 0x8, scoped, tag = 'scoped memory for tpu_custom_call.1']
    #allocation7 [shape = 'u8[32768]{0}', space=vmem, size = 0x8000, scoped, tag = 'input window, operand 1']
    #allocation8 [shape = 's32[2]{0}', space=sflag, size = 0x8, scoped, tag = 'scoped memory for tpu_custom_call.1']
    #allocation9 [shape = 'u8[8192]{0}', space=vmem, size = 0x2000, scoped, tag = 'output window, operand 0']
    #allocation10 [shape = 'u8[8192]{0}', space=vmem, size = 0x2000, scoped, tag = 'output window, operand 1']
    #allocation11 [shape = 's32[2]{0}', space=sflag, size = 0x8, scoped, tag = 'scoped memory for tpu_custom_call.1']
    %9 = vsyncpa [#allocation5], 0
    %s10 = scalar_lea.sflag [#allocation5], 1
    %11 = vsyncpa %s10, 0
    %12 = vsyncpa [#allocation8], 0
    %s13 = scalar_lea.sflag [#allocation8], 1
    %14 = vsyncpa %s13, 0
    %15 = vsyncpa [#allocation6], 0
    %s16 = scalar_lea.sflag [#allocation6], 1
    %17 = vsyncpa %s16, 0
    %18 = vsyncpa [#allocation11], 0
    %s19 = scalar_lea.sflag [#allocation11], 1
    %20 = vsyncpa %s19, 0
    loop: start=0, step=1, limit=4
    $region2: #{tpu_custom_call.1} parent=1 // loop_pre_header
      _
    $region3: #{tpu_custom_call.1} parent=1 // loop_header
      %s22 = sphi 0, %s26
      %p23 = scmp.ge.s32.totalorder %s22, 4
      %s29 = sphi 0, %s48
      %s30 = sphi 0, %s44
      %s31 = sphi 0, %s40
      %s32 = sphi 0, %s29
      %s33 = sphi 0, %s30
      %s34 = sphi 0, %s31
      %s35 = sphi 0, %s32
      %s36 = sphi 0, %s33
      %s37 = sphi 0, %s34
      %s55 = sphi 0, %s57
      %s58 = sphi 0, %s55
      %s59 = sphi 0, %s58
      %s75 = sphi 0, %s59
      %s85 = sphi 0, %s87
      %s88 = sphi 0, %s85
      %s89 = sphi 0, %s88
      %s105 = sphi 0, %s89
      %s113 = sphi 0, %s115
      %s116 = sphi 0, %s113
      %s117 = sphi 0, %s116
      %s133 = sphi 0, %s117
      %s141 = sphi 0, %s143
      %s144 = sphi 0, %s141
      %s145 = sphi 0, %s144
      %s161 = sphi 0, %s145
    $region4: #{tpu_custom_call.1} parent=1 // loop_header_branch
      %25 = sbr.rel (%p23) target = $region8
    $region5: #{tpu_custom_call.1} parent=1 // loop_body
      %s27 = ssub.s32 %s22, 1
      %s28 = ssub.s32 %s22, 2
      %s38 = sadd.s32 1, %s31
      %p39 = scmp.ge.s32.totalorder %s38, 1
      %s40 = scalar_select %p39, 0, %s38
      %s41 = sadd.s32 1, %s30
      %s42 = scalar_select %p39, %s41, %s30
      %p43 = scmp.ge.s32.totalorder %s42, 1
      %s44 = scalar_select %p43, 0, %s42
      %s45 = sadd.s32 1, %s29
      %s46 = scalar_select %p43, %s45, %s29
      %p47 = scmp.ge.s32.totalorder %s46, 2
      %s48 = scalar_select %p47, 0, %s46
      %s49 = sadd.s32 %s30, %s31
      %s50 = sadd.s32 %s44, %s40
      %s51 = ssub.s32 %s29, %s48
      %s52 = ssub.s32 %s49, %s50
      %s53 = sor.u32 %s51, %s52
      %p54 = scmp.eq.s32.totalorder %s53, 0
      %s56 = sadd.s32 %s55, 1
      %s57 = scalar_select %p54, %s55, %s56
      %p60 = pneg %p54
      %p61 = scmp.eq.s32.totalorder %s22, 1
      %p62 = por %p60, %p61
      %p63 = scmp.ne.s32.totalorder %s55, %s58
      %p64 = scmp.eq.s32.totalorder %s22, 0
      %p65 = por %p63, %p64
      %p66 = scmp.ne.s32.totalorder %s55, %s58
      %p67 = scmp.eq.s32.totalorder %s27, 1
      %p68 = por %p66, %p67
      %p69 = scmp.ne.s32.totalorder %s58, %s59
      %p70 = scmp.eq.s32.totalorder %s27, 0
      %p71 = por %p69, %p70
      %p72 = scmp.ne.s32.totalorder %s58, %s59
      %p73 = scmp.eq.s32.totalorder %s28, 1
      %p74 = por %p72, %p73
      %p76 = scmp.ne.s32.totalorder %s59, %s75
      %p77 = scmp.eq.s32.totalorder %s28, 0
      %p78 = por %p76, %p77
      %s79 = sadd.s32 %s30, %s31
      %s80 = sadd.s32 %s44, %s40
      %s81 = ssub.s32 %s29, %s48
      %s82 = ssub.s32 %s79, %s80
      %s83 = sor.u32 %s81, %s82
      %p84 = scmp.eq.s32.totalorder %s83, 0
      %s86 = sadd.s32 %s85, 1
      %s87 = scalar_select %p84, %s85, %s86
      %p90 = pneg %p84
      %p91 = scmp.eq.s32.totalorder %s22, 1
      %p92 = por %p90, %p91
      %p93 = scmp.ne.s32.totalorder %s85, %s88
      %p94 = scmp.eq.s32.totalorder %s22, 0
      %p95 = por %p93, %p94
      %p96 = scmp.ne.s32.totalorder %s85, %s88
      %p97 = scmp.eq.s32.totalorder %s27, 1
      %p98 = por %p96, %p97
      %p99 = scmp.ne.s32.totalorder %s88, %s89
      %p100 = scmp.eq.s32.totalorder %s27, 0
      %p101 = por %p99, %p100
      %p102 = scmp.ne.s32.totalorder %s88, %s89
      %p103 = scmp.eq.s32.totalorder %s28, 1
      %p104 = por %p102, %p103
      %p106 = scmp.ne.s32.totalorder %s89, %s105
      %p107 = scmp.eq.s32.totalorder %s28, 0
      %p108 = por %p106, %p107
      %s109 = ssub.s32 %s29, %s48
      %s110 = ssub.s32 %s30, %s44
      %s111 = sor.u32 %s109, %s110
      %p112 = scmp.eq.s32.totalorder %s111, 0
      %s114 = sadd.s32 %s113, 1
      %s115 = scalar_select %p112, %s113, %s114
      %p118 = pneg %p112
      %p119 = scmp.eq.s32.totalorder %s22, 1
      %p120 = por %p118, %p119
      %p121 = scmp.ne.s32.totalorder %s113, %s116
      %p122 = scmp.eq.s32.totalorder %s22, 0
      %p123 = por %p121, %p122
      %p124 = scmp.ne.s32.totalorder %s113, %s116
      %p125 = scmp.eq.s32.totalorder %s27, 1
      %p126 = por %p124, %p125
      %p127 = scmp.ne.s32.totalorder %s116, %s117
      %p128 = scmp.eq.s32.totalorder %s27, 0
      %p129 = por %p127, %p128
      %p130 = scmp.ne.s32.totalorder %s116, %s117
      %p131 = scmp.eq.s32.totalorder %s28, 1
      %p132 = por %p130, %p131
      %p134 = scmp.ne.s32.totalorder %s117, %s133
      %p135 = scmp.eq.s32.totalorder %s28, 0
      %p136 = por %p134, %p135
      %s137 = ssub.s32 %s29, %s48
      %s138 = ssub.s32 %s30, %s44
      %s139 = sor.u32 %s137, %s138
      %p140 = scmp.eq.s32.totalorder %s139, 0
      %s142 = sadd.s32 %s141, 1
      %s143 = scalar_select %p140, %s141, %s142
      %p146 = pneg %p140
      %p147 = scmp.eq.s32.totalorder %s22, 1
      %p148 = por %p146, %p147
      %p149 = scmp.ne.s32.totalorder %s141, %s144
      %p150 = scmp.eq.s32.totalorder %s22, 0
      %p151 = por %p149, %p150
      %p152 = scmp.ne.s32.totalorder %s141, %s144
      %p153 = scmp.eq.s32.totalorder %s27, 1
      %p154 = por %p152, %p153
      %p155 = scmp.ne.s32.totalorder %s144, %s145
      %p156 = scmp.eq.s32.totalorder %s27, 0
      %p157 = por %p155, %p156
      %p158 = scmp.ne.s32.totalorder %s144, %s145
      %p159 = scmp.eq.s32.totalorder %s28, 1
      %p160 = por %p158, %p159
      %p162 = scmp.ne.s32.totalorder %s145, %s161
      %p163 = scmp.eq.s32.totalorder %s28, 0
      %p164 = por %p162, %p163
      %p165 = scmp.le.s32.totalorder 1, %s22
      %p166 = scmp.lt.s32.totalorder %s22, 3
      %p167 = pnand %p165, %p166
      %p168 = pneg %p167
      // Predicated region
      $region9: #{tpu_custom_call.1} parent=5 // pred_check
        _
      $region10: #{tpu_custom_call.1} parent=5 // pred_check_branch
        %170 = sbr.rel (%p167) target = $region12
      $region11: #{tpu_custom_call.1} parent=5 // pred_region
        %s171 = ssub.s32 %s22, 1
      $region12: #{tpu_custom_call.1} parent=5 // pred_fallthru
        _
      %p172 = scmp.lt.s32.totalorder %s22, 2
      // Predicated region
      $region13: #{tpu_custom_call.1} parent=5 // pred_check
        %p173 = pneg %p172
      $region14: #{tpu_custom_call.1} parent=5 // pred_check_branch
        %175 = sbr.rel (%p173) target = $region16
      $region15: #{tpu_custom_call.1} parent=5 // pred_region
        // Predicated region
        $region17: #{tpu_custom_call.1} parent=15 // pred_check
          %p176 = pneg %p65
        $region18: #{tpu_custom_call.1} parent=15 // pred_check_branch
          %178 = sbr.rel (%p176) target = $region20
        $region19: #{tpu_custom_call.1} parent=15 // pred_region
          %s179 = sand.u32 %s55, 1
          %s180 = scalar_lea.sflag [#allocation5], %s179
          %s181 = sand.u32 %s55, 1
          %s182 = smul.addr %s181, 32
          %s183 = scalar_lea.vmem [#allocation4], %s182
          %s184 = sadd.s32 %s30, %s31
          %s186 = ssub.s32 512, 512
          %187 = vsyncadd %s180, %s186
          %s188 = smul.addr %s29, 4
          %s189 = sadd.s32 %s184, %s188
          %s190 = smul.addr %s189, 128
          %s191 = scalar_lea.hbm %s0, %s190
          %s192 = sshll.u32 %s183, 4
          %s193 = int_to_ptr.vmem [resolvable:$true] %s192
          %198 = dma.hbm_to_vmem [thread:$0]  %s191, 512, %s193, %s180, 128, 128, 8
        $region20: #{tpu_custom_call.1} parent=15 // pred_fallthru
          _
        // Predicated region
        $region21: #{tpu_custom_call.1} parent=15 // pred_check
          %p199 = pneg %p95
        $region22: #{tpu_custom_call.1} parent=15 // pred_check_branch
          %201 = sbr.rel (%p199) target = $region24
        $region23: #{tpu_custom_call.1} parent=15 // pred_region
          %s202 = sand.u32 %s85, 1
          %s203 = scalar_lea.sflag [#allocation8], %s202
          %s204 = sand.u32 %s85, 1
          %s205 = smul.addr %s204, 32
          %s206 = scalar_lea.vmem [#allocation7], %s205
          %s207 = sadd.s32 %s30, %s31
          %s209 = ssub.s32 512, 512
          %210 = vsyncadd %s203, %s209
          %s211 = smul.addr %s29, 4
          %s212 = sadd.s32 %s207, %s211
          %s213 = smul.addr %s212, 128
          %s214 = scalar_lea.hbm %s1, %s213
          %s215 = sshll.u32 %s206, 4
          %s216 = int_to_ptr.vmem [resolvable:$true] %s215
          %221 = dma.hbm_to_vmem [thread:$0]  %s214, 512, %s216, %s203, 128, 128, 8
        $region24: #{tpu_custom_call.1} parent=15 // pred_fallthru
          _
      $region16: #{tpu_custom_call.1} parent=5 // pred_fallthru
        _
      %p222 = scmp.le.s32.totalorder 1, %s22
      %p223 = scmp.lt.s32.totalorder %s22, 3
      %p224 = pnand %p222, %p223
      %p225 = pneg %p224
      // Predicated region
      $region25: #{tpu_custom_call.1} parent=5 // pred_check
        _
      $region26: #{tpu_custom_call.1} parent=5 // pred_check_branch
        %227 = sbr.rel (%p224) target = $region28
      $region27: #{tpu_custom_call.1} parent=5 // pred_region
        %s228 = ssub.s32 %s22, 1
        %s229 = sand.u32 %s58, 1
        %s230 = scalar_lea.sflag [#allocation5], %s229
        %s231 = sand.u32 %s58, 1
        %s232 = smul.addr %s231, 32
        %s233 = scalar_lea.vmem [#allocation4], %s232
        // Predicated region
        $region29: #{tpu_custom_call.1} parent=27 // pred_check
          %p234 = pneg %p71
        $region30: #{tpu_custom_call.1} parent=27 // pred_check_branch
          %236 = sbr.rel (%p234) target = $region32
        $region31: #{tpu_custom_call.1} parent=27 // pred_region
          %237 = dma.done %s230, 512
        $region32: #{tpu_custom_call.1} parent=27 // pred_fallthru
          _
        %s238 = sand.u32 %s88, 1
        %s239 = scalar_lea.sflag [#allocation8], %s238
        %s240 = sand.u32 %s88, 1
        %s241 = smul.addr %s240, 32
        %s242 = scalar_lea.vmem [#allocation7], %s241
        // Predicated region
        $region33: #{tpu_custom_call.1} parent=27 // pred_check
          %p243 = pneg %p101
        $region34: #{tpu_custom_call.1} parent=27 // pred_check_branch
          %245 = sbr.rel (%p243) target = $region36
        $region35: #{tpu_custom_call.1} parent=27 // pred_region
          %246 = dma.done %s239, 512
        $region36: #{tpu_custom_call.1} parent=27 // pred_fallthru
          _
        %s247 = sand.u32 %s58, 1
        %s248 = scalar_lea.sflag [#allocation5], %s247
        %s249 = sand.u32 %s58, 1
        %s250 = smul.addr %s249, 32
        %s251 = scalar_lea.vmem [#allocation4], %s250
        %p252 = pneg %p71
        %p253 = pneg %p68
        %s254 = sand.u32 %s88, 1
        %s255 = scalar_lea.sflag [#allocation8], %s254
        %s256 = sand.u32 %s88, 1
        %s257 = smul.addr %s256, 32
        %s258 = scalar_lea.vmem [#allocation7], %s257
        %p259 = pneg %p101
        %p260 = pneg %p98
        %p261 = pneg %p129
        %p262 = pneg %p126
        %s263 = sand.u32 %s116, 1
        %s264 = scalar_lea.sflag [#allocation6], %s263
        %s265 = sand.u32 %s116, 1
        %s266 = smul.addr %s265, 8
        %s267 = scalar_lea.vmem [#allocation9], %s266
        %p268 = pneg %p157
        %p269 = pneg %p154
        %s270 = sand.u32 %s144, 1
        %s271 = scalar_lea.sflag [#allocation11], %s270
        %s272 = sand.u32 %s144, 1
        %s273 = smul.addr %s272, 8
        %s274 = scalar_lea.vmem [#allocation10], %s273
        %s275 = sadd.s32 %s33, %s34
        %s276 = sadd.s32 %s33, %s34
        %p277 = scmp.eq.s32.totalorder %s34, 0
        // Predicated region
        $region37: #{tpu_custom_call.1} parent=27 // pred_check
          %p278 = pneg %p277
        $region38: #{tpu_custom_call.1} parent=27 // pred_check_branch
          %280 = sbr.rel (%p278) target = $region40
        $region39: #{tpu_custom_call.1} parent=27 // pred_region
          %281 = vst [vmem:[#allocation2] sm:$0xff] 0.0
          %282 = vst [vmem:[#allocation3] sm:$0xff] 0.0
        $region40: #{tpu_custom_call.1} parent=27 // pred_fallthru
          _
        %v283 = vld [vmem:[%s233] sm:$0xff]
        %v284 = vld [vmem:[%s233 + $0x8] sm:$0xff]
        %v285 = vld [vmem:[%s233 + $0x10] sm:$0xff]
        %v286 = vld [vmem:[%s233 + $0x18] sm:$0xff]
        %v287 = vld [vmem:[%s242] sm:$0xff]
        %v288 = vld [vmem:[%s242 + $0x8] sm:$0xff]
        %v289 = vld [vmem:[%s242 + $0x10] sm:$0xff]
        %v290 = vld [vmem:[%s242 + $0x18] sm:$0xff]
        %v291 = vsub.f32 %v283, %v287
        %v292 = vsub.f32 %v284, %v288
        %v293 = vsub.f32 %v285, %v289
        %v294 = vsub.f32 %v286, %v290
        %v295 = vmul.f32 %v291, %v291
        %v296 = vmul.f32 %v292, %v292
        %v297 = vmul.f32 %v293, %v293
        %v298 = vmul.f32 %v294, %v294
        %v299 = vmax.f32 %v283, %v284
        %v300 = vmax.f32 %v285, %v286
        %v301 = vmax.f32 %v299, %v300
        %v302 = vsub.f32 %v283, %v301
        %v303 = vsub.f32 %v284, %v301
        %v304 = vsub.f32 %v285, %v301
        %v305 = vsub.f32 %v286, %v301
        %v306 = vmul.f32 %v302, 1.442695
        %v307 = vpow.pop %v306
        %v308 = vmul.f32 %v303, 1.442695
        %v309 = vpow.pop %v308
        %v310 = vmul.f32 %v304, 1.442695
        %v311 = vpow.pop %v310
        %v312 = vmul.f32 %v305, 1.442695
        %v313 = vpow.pop %v312
        %v314 = vadd.f32 %v307, %v309
        %v315 = vadd.f32 %v314, %v311
        %v316 = vadd.f32 %v315, %v313
        %v317 = vlog2.pop %v316
        %v318 = vmul.f32 %v317, 0.6931472
        %v319 = vadd.f32 %v318, %v301
        %v320 = vsub.f32 %v283, %v319
        %v321 = vsub.f32 %v284, %v319
        %v322 = vsub.f32 %v285, %v319
        %v323 = vsub.f32 %v286, %v319
        %vm324 = vcmp.gt.f32.partialorder %v287, 0.0
        %vm325 = vcmp.gt.f32.partialorder %v288, 0.0
        %vm326 = vcmp.gt.f32.partialorder %v289, 0.0
        %vm327 = vcmp.gt.f32.partialorder %v290, 0.0
        %v328 = vsel %vm324, %v287, 1.0
        %v329 = vsel %vm325, %v288, 1.0
        %v330 = vsel %vm326, %v289, 1.0
        %v331 = vsel %vm327, %v290, 1.0
        %v332 = vlog2.pop %v328
        %v333 = vmul.f32 %v332, 0.6931472
        %v334 = vlog2.pop %v329
        %v335 = vmul.f32 %v334, 0.6931472
        %v336 = vlog2.pop %v330
        %v337 = vmul.f32 %v336, 0.6931472
        %v338 = vlog2.pop %v331
        %v339 = vmul.f32 %v338, 0.6931472
        %v340 = vmul.f32 %v287, %v333
        %v341 = vmul.f32 %v288, %v335
        %v342 = vmul.f32 %v289, %v337
        %v343 = vmul.f32 %v290, %v339
        %v344 = vsel %vm324, %v340, 0.0
        %v345 = vsel %vm325, %v341, 0.0
        %v346 = vsel %vm326, %v342, 0.0
        %v347 = vsel %vm327, %v343, 0.0
        %v348 = vmul.f32 %v287, %v320
        %v349 = vmul.f32 %v288, %v321
        %v350 = vmul.f32 %v289, %v322
        %v351 = vmul.f32 %v290, %v323
        %v352 = vsub.f32 %v344, %v348
        %v353 = vsub.f32 %v345, %v349
        %v354 = vsub.f32 %v346, %v350
        %v355 = vsub.f32 %v347, %v351
        %v356 = vadd.f32 %v295, %v296
        %v357 = vadd.f32 %v356, %v297
        %v358 = vadd.f32 %v357, %v298
        %v359 = vadd.f32 %v358, 0.0
        %v360 = vadd.f32 %v352, %v353
        %v361 = vadd.f32 %v360, %v354
        %v362 = vadd.f32 %v361, %v355
        %v363 = vadd.f32 %v362, 0.0
        %v364 = vld [vmem:[#allocation2] sm:$0xff]
        %v365 = vadd.f32 %v364, %v359
        %366 = vst [vmem:[#allocation2] sm:$0xff] %v365
        %v367 = vld [vmem:[#allocation3] sm:$0xff]
        %v368 = vadd.f32 %v367, %v363
        %369 = vst [vmem:[#allocation3] sm:$0xff] %v368
        // Predicated region
        $region41: #{tpu_custom_call.1} parent=27 // pred_check
          %p370 = pneg %p277
        $region42: #{tpu_custom_call.1} parent=27 // pred_check_branch
          %372 = sbr.rel (%p370) target = $region44
        $region43: #{tpu_custom_call.1} parent=27 // pred_region
          %v373 = vld [vmem:[#allocation2] sm:$0xff]
          %374 = vst [vmem:[%s267] sm:$0xff] %v373
          %v375 = vld [vmem:[#allocation3] sm:$0xff]
          %376 = vst [vmem:[%s274] sm:$0xff] %v375
        $region44: #{tpu_custom_call.1} parent=27 // pred_fallthru
          _
        %s377 = sand.u32 %s116, 1
        %s378 = scalar_lea.sflag [#allocation6], %s377
        %s379 = sand.u32 %s116, 1
        %s380 = smul.addr %s379, 8
        %s381 = scalar_lea.vmem [#allocation9], %s380
        %s382 = sand.u32 %s144, 1
        %s383 = scalar_lea.sflag [#allocation11], %s382
        %s384 = sand.u32 %s144, 1
        %s385 = smul.addr %s384, 8
        %s386 = scalar_lea.vmem [#allocation10], %s385
        // Predicated region
        $region45: #{tpu_custom_call.1} parent=27 // pred_check
          %p387 = pneg %p126
        $region46: #{tpu_custom_call.1} parent=27 // pred_check_branch
          %389 = sbr.rel (%p387) target = $region48
        $region47: #{tpu_custom_call.1} parent=27 // pred_region
          %s391 = ssub.s32 128, 128
          %392 = vsyncadd %s378, %s391
          %s393 = sadd.s32 %s33, %s32
          %s394 = smul.addr %s393, 128
          %s395 = scalar_lea.hbm %s2, %s394
          %s397 = sshll.u32 %s381, 4
          %s398 = int_to_ptr.vmem [resolvable:$true] %s397
          %400 = dma.vmem_to_hbm [thread:$0]  %s398, 128, %s395, %s378
        $region48: #{tpu_custom_call.1} parent=27 // pred_fallthru
          _
        // Predicated region
        $region49: #{tpu_custom_call.1} parent=27 // pred_check
          %p401 = pneg %p154
        $region50: #{tpu_custom_call.1} parent=27 // pred_check_branch
          %403 = sbr.rel (%p401) target = $region52
        $region51: #{tpu_custom_call.1} parent=27 // pred_region
          %s405 = ssub.s32 128, 128
          %406 = vsyncadd %s383, %s405
          %s407 = sadd.s32 %s33, %s32
          %s408 = smul.addr %s407, 128
          %s409 = scalar_lea.hbm %s3, %s408
          %s411 = sshll.u32 %s386, 4
          %s412 = int_to_ptr.vmem [resolvable:$true] %s411
          %414 = dma.vmem_to_hbm [thread:$0]  %s412, 128, %s409, %s383
        $region52: #{tpu_custom_call.1} parent=27 // pred_fallthru
          _
      $region28: #{tpu_custom_call.1} parent=5 // pred_fallthru
        _
      %p415 = scmp.le.s32.totalorder 2, %s22
      // Predicated region
      $region53: #{tpu_custom_call.1} parent=5 // pred_check
        %p416 = pneg %p415
      $region54: #{tpu_custom_call.1} parent=5 // pred_check_branch
        %418 = sbr.rel (%p416) target = $region56
      $region55: #{tpu_custom_call.1} parent=5 // pred_region
        %s419 = ssub.s32 %s22, 2
        // Predicated region
        $region57: #{tpu_custom_call.1} parent=55 // pred_check
          %p420 = pneg %p132
        $region58: #{tpu_custom_call.1} parent=55 // pred_check_branch
          %422 = sbr.rel (%p420) target = $region60
        $region59: #{tpu_custom_call.1} parent=55 // pred_region
          %s423 = sand.u32 %s117, 1
          %s424 = scalar_lea.sflag [#allocation6], %s423
          %s425 = sand.u32 %s117, 1
          %s426 = smul.addr %s425, 8
          %s427 = scalar_lea.vmem [#allocation9], %s426
          %428 = dma.done %s424, 128
        $region60: #{tpu_custom_call.1} parent=55 // pred_fallthru
          _
        // Predicated region
        $region61: #{tpu_custom_call.1} parent=55 // pred_check
          %p429 = pneg %p160
        $region62: #{tpu_custom_call.1} parent=55 // pred_check_branch
          %431 = sbr.rel (%p429) target = $region64
        $region63: #{tpu_custom_call.1} parent=55 // pred_region
          %s432 = sand.u32 %s145, 1
          %s433 = scalar_lea.sflag [#allocation11], %s432
          %s434 = sand.u32 %s145, 1
          %s435 = smul.addr %s434, 8
          %s436 = scalar_lea.vmem [#allocation10], %s435
          %437 = dma.done %s433, 128
        $region64: #{tpu_custom_call.1} parent=55 // pred_fallthru
          _
      $region56: #{tpu_custom_call.1} parent=5 // pred_fallthru
        _
    $region6: #{tpu_custom_call.1} parent=1 // loop_footer
      %s26 = sadd.s32 1, %s22
    $region7: #{tpu_custom_call.1} parent=1 // loop_footer_branch
      %21 = sbr.rel target = $region3
    $region8: #{tpu_custom_call.1} parent=1 // loop_exit
      _
    %438 = vsyncpa [#allocation5], 1
    %s439 = scalar_lea.sflag [#allocation5], 1
    %440 = vsyncpa %s439, 1
    %441 = vsyncpa [#allocation8], 1
    %s442 = scalar_lea.sflag [#allocation8], 1
    %443 = vsyncpa %s442, 1
    %444 = vsyncpa [#allocation6], 1
    %s445 = scalar_lea.sflag [#allocation6], 1
    %446 = vsyncpa %s445, 1
    %447 = vsyncpa [#allocation11], 1
    %s448 = scalar_lea.sflag [#allocation11], 1
    %449 = vsyncpa %s448, 1

</llo_original>
